<compile_context>
chip_gen: v6e
topology: v6e:2x2x1
jax: 0.10.0
libtpu: 0.0.40
codegen_flags: <defaults>
</compile_context>

<pallas_src>
import jax
import jax.numpy as jnp
import numpy as np
from jax.experimental import pallas as pl
from jax.experimental.pallas import tpu as pltpu

# Fixed module configuration (mirrors ClothClsLoss.__init__ / ClothWild cfg).
CLOTH_TYPES = ('uppercloth', 'coat', 'pants', 'skirts', 'shoes', 'hair')
DP_PARTS = {
    'head': (22, 23),
    'upperbody': (0, 1, 14, 15, 16, 17, 18, 19, 20, 21),
    'lowerbody': (6, 7, 8, 9, 10, 11, 12, 13),
    'foot': (4, 5),
}
PART_CLOTHES = {
    'head': ('hair',),
    'upperbody': ('uppercloth', 'coat'),
    'lowerbody': ('pants', 'skirts'),
    'foot': ('shoes',),
}
CLOTH_TO_PART = {cl: part for part, cls_ in PART_CLOTHES.items() for cl in cls_}


def _any_lane(mask):
    """OR-reduce a bool mask along the last (lane) axis -> (B, 1) bool.

    Single int32 cast + max-reduce (robust Mosaic lowering), instead of one
    cast per compared id as in the previous version."""
    return jnp.max(mask.astype(jnp.int32), axis=-1, keepdims=True) > 0


def _cloth_cls_loss_kernel(pred_ref, patch_ref, cloth_ref, loss_ref):
    patch = patch_ref[...]          # (B, P) int32
    cloth = cloth_ref[...]          # (B, Q) int32
    pred = pred_ref[...]            # (B, C) float32

    # Body-part presence per batch row via range tests (DP ids are contiguous
    # runs).  `patch >= 0` guard keeps exact equality-semantics for any
    # (possibly negative) input values.
    head = _any_lane((patch >= 22) & (patch <= 23))
    upper = _any_lane(((patch >= 0) & (patch <= 1)) |
                      ((patch >= 14) & (patch <= 21)))
    lower = _any_lane((patch >= 6) & (patch <= 13))
    foot = _any_lane((patch >= 4) & (patch <= 5))
    part_present = {'head': head, 'upperbody': upper,
                    'lowerbody': lower, 'foot': foot}

    # Dense (B, C) `valid` / `index_gt` masks, accumulated in the bool domain
    # via lane one-hots (pure compares / bitwise ops), cast to f32 once each.
    lane = jax.lax.broadcasted_iota(jnp.int32, pred.shape, dimension=1)  # (B,C)
    valid_b = None
    gt_b = None
    for c, name in enumerate(CLOTH_TYPES):
        onehot = lane == c                                   # (B, C) bool
        v = onehot & part_present[CLOTH_TO_PART[name]]       # (B, C) bool
        g = onehot & _any_lane(cloth == (c + 1))             # (B, C) bool
        valid_b = v if valid_b is None else (valid_b | v)
        gt_b = g if gt_b is None else (gt_b | g)
    valid = valid_b.astype(jnp.float32)
    gt = gt_b.astype(jnp.float32)

    # nn.BCELoss(reduction='none'), with PyTorch's log clamp at -100 (EUP ops,
    # hidden under the VALU stream).
    log_p = jnp.maximum(jnp.log(pred), -100.0)
    log_1mp = jnp.maximum(jnp.log(1.0 - pred), -100.0)
    bce = -(gt * log_p + (1.0 - gt) * log_1mp)

    # loss[valid > 0].mean()  ==  sum(bce * valid) / sum(valid)
    total = jnp.sum(bce * valid, keepdims=True)   # (1, 1)
    count = jnp.sum(valid, keepdims=True)         # (1, 1)
    loss_ref[...] = total / count                 # 0/0 -> NaN, as in torch


def cloth_cls_loss(out, patch_idx, cloth_idx):
    """JAX/Pallas equivalent of ClothClsLoss.forward(out, patch_idx, cloth_idx)."""
    out = jnp.asarray(out, jnp.float32)
    patch_idx = jnp.asarray(patch_idx, jnp.int32)
    cloth_idx = jnp.asarray(cloth_idx, jnp.int32)

    B, C = out.shape
    assert C == len(CLOTH_TYPES), "out must have one column per cloth type"

    # No padding: each operand is a tiny full-array VMEM block; Mosaic masks
    # the partial (8, 128) tiles and reduces only over logical elements.
    loss = pl.pallas_call(
        _cloth_cls_loss_kernel,
        out_shape=jax.ShapeDtypeStruct((1, 1), jnp.float32),
        in_specs=[
            pl.BlockSpec(memory_space=pltpu.MemorySpace.VMEM),   # out   (B, C)
            pl.BlockSpec(memory_space=pltpu.MemorySpace.VMEM),   # patch (B, P)
            pl.BlockSpec(memory_space=pltpu.MemorySpace.VMEM),   # cloth (B, Q)
        ],
        out_specs=pl.BlockSpec(memory_space=pltpu.MemorySpace.VMEM),
    )(out, patch_idx, cloth_idx)

    return loss[0, 0]


def _reference(out, patch_idx, cloth_idx):
    """Pure-numpy reference mirroring the PyTorch forward exactly."""
    out = np.asarray(out, np.float32)
    patch_idx = np.asarray(patch_idx)
    cloth_idx = np.asarray(cloth_idx)
    B, C = out.shape
    valid = np.zeros_like(out)
    index_gt = np.zeros_like(out)
    for part in DP_PARTS:
        valid_one_part = np.zeros((B,), np.float32)
        for part_idx in DP_PARTS[part]:
            valid_one_part += (patch_idx == part_idx).any(1)
        for cloth in PART_CLOTHES[part]:
            if cloth in CLOTH_TYPES:
                valid[valid_one_part > 0, CLOTH_TYPES.index(cloth)] = 1
    for idx in range(C):
        index_gt[:, idx] += (cloth_idx == idx + 1).any(1)
    log_o = np.maximum(np.log(out), -100.0)
    log_1mo = np.maximum(np.log(1.0 - out), -100.0)
    bce = -(index_gt * log_o + (1.0 - index_gt) * log_1mo)
    sel = bce[valid > 0]
    return np.float32(sel.mean()) if sel.size else np.float32(np.nan)


if __name__ == "__main__":
    B, P, Q = 4, 24, 8
    C = len(CLOTH_TYPES)

    key = jax.random.PRNGKey(0)
    k1, k2, k3 = jax.random.split(key, 3)

    out = jax.nn.sigmoid(jax.random.normal(k1, (B, C), dtype=jnp.float32))
    patch_idx = jax.random.randint(k2, (B, P), 0, 24, dtype=jnp.int32)
    cloth_idx = jax.random.randint(k3, (B, Q), 0, C + 1, dtype=jnp.int32)

    loss = cloth_cls_loss(out, patch_idx, cloth_idx)
    loss = jax.block_until_ready(loss)

    ref = _reference(np.asarray(out), np.asarray(patch_idx), np.asarray(cloth_idx))
    np.testing.assert_allclose(np.float32(loss), ref, rtol=1e-4, atol=1e-5)

    print("KERNEL_OK")
</pallas_src>

<mosaic_0001>
module attributes {stable_mosaic.version = 11 : i64} {
  func.func @_cloth_cls_loss_kernel(%arg0: memref<4x6xf32, #tpu.memory_space<vmem>>, %arg1: memref<4x24xi32, #tpu.memory_space<vmem>>, %arg2: memref<4x8xi32, #tpu.memory_space<vmem>>, %arg3: memref<1x1xf32, #tpu.memory_space<vmem>>) attributes {dimension_semantics = [], scalar_prefetch = 0 : i64, scratch_operands = 0 : i64, tpu.core_type = #tpu.core_type<tc>} {
    %c0 = arith.constant 0 : index
    %c0_0 = arith.constant 0 : index
    %0 = vector.load %arg1[%c0, %c0_0] : memref<4x24xi32, #tpu.memory_space<vmem>>, vector<4x24xi32>
    %c0_1 = arith.constant 0 : index
    %c0_2 = arith.constant 0 : index
    %1 = vector.load %arg2[%c0_1, %c0_2] : memref<4x8xi32, #tpu.memory_space<vmem>>, vector<4x8xi32>
    %c0_3 = arith.constant 0 : index
    %c0_4 = arith.constant 0 : index
    %2 = vector.load %arg0[%c0_3, %c0_4] : memref<4x6xf32, #tpu.memory_space<vmem>>, vector<4x6xf32>
    %c22_i32 = arith.constant 22 : i32
    %3 = vector.broadcast %c22_i32 : i32 to vector<4x24xi32>
    %4 = arith.cmpi sge, %0, %3 : vector<4x24xi32>
    %c23_i32 = arith.constant 23 : i32
    %5 = vector.broadcast %c23_i32 : i32 to vector<4x24xi32>
    %6 = arith.cmpi sle, %0, %5 : vector<4x24xi32>
    %7 = arith.andi %4, %6 : vector<4x24xi1>
    %8 = arith.extui %7 : vector<4x24xi1> to vector<4x24xi32>
    %cst = arith.constant dense<-2147483648> : vector<4xi32>
    %9 = vector.multi_reduction <maxsi>, %8, %cst [1] : vector<4x24xi32> to vector<4xi32>
    %10 = vector.shape_cast %9 : vector<4xi32> to vector<4x1xi32>
    %c0_i32 = arith.constant 0 : i32
    %11 = vector.broadcast %c0_i32 : i32 to vector<4x1xi32>
    %12 = arith.cmpi sgt, %10, %11 : vector<4x1xi32>
    %c0_i32_5 = arith.constant 0 : i32
    %13 = vector.broadcast %c0_i32_5 : i32 to vector<4x24xi32>
    %14 = arith.cmpi sge, %0, %13 : vector<4x24xi32>
    %c1_i32 = arith.constant 1 : i32
    %15 = vector.broadcast %c1_i32 : i32 to vector<4x24xi32>
    %16 = arith.cmpi sle, %0, %15 : vector<4x24xi32>
    %17 = arith.andi %14, %16 : vector<4x24xi1>
    %c14_i32 = arith.constant 14 : i32
    %18 = vector.broadcast %c14_i32 : i32 to vector<4x24xi32>
    %19 = arith.cmpi sge, %0, %18 : vector<4x24xi32>
    %c21_i32 = arith.constant 21 : i32
    %20 = vector.broadcast %c21_i32 : i32 to vector<4x24xi32>
    %21 = arith.cmpi sle, %0, %20 : vector<4x24xi32>
    %22 = arith.andi %19, %21 : vector<4x24xi1>
    %23 = arith.ori %17, %22 : vector<4x24xi1>
    %24 = arith.extui %23 : vector<4x24xi1> to vector<4x24xi32>
    %cst_6 = arith.constant dense<-2147483648> : vector<4xi32>
    %25 = vector.multi_reduction <maxsi>, %24, %cst_6 [1] : vector<4x24xi32> to vector<4xi32>
    %26 = vector.shape_cast %25 : vector<4xi32> to vector<4x1xi32>
    %c0_i32_7 = arith.constant 0 : i32
    %27 = vector.broadcast %c0_i32_7 : i32 to vector<4x1xi32>
    %28 = arith.cmpi sgt, %26, %27 : vector<4x1xi32>
    %c6_i32 = arith.constant 6 : i32
    %29 = vector.broadcast %c6_i32 : i32 to vector<4x24xi32>
    %30 = arith.cmpi sge, %0, %29 : vector<4x24xi32>
    %c13_i32 = arith.constant 13 : i32
    %31 = vector.broadcast %c13_i32 : i32 to vector<4x24xi32>
    %32 = arith.cmpi sle, %0, %31 : vector<4x24xi32>
    %33 = arith.andi %30, %32 : vector<4x24xi1>
    %34 = arith.extui %33 : vector<4x24xi1> to vector<4x24xi32>
    %cst_8 = arith.constant dense<-2147483648> : vector<4xi32>
    %35 = vector.multi_reduction <maxsi>, %34, %cst_8 [1] : vector<4x24xi32> to vector<4xi32>
    %36 = vector.shape_cast %35 : vector<4xi32> to vector<4x1xi32>
    %c0_i32_9 = arith.constant 0 : i32
    %37 = vector.broadcast %c0_i32_9 : i32 to vector<4x1xi32>
    %38 = arith.cmpi sgt, %36, %37 : vector<4x1xi32>
    %c4_i32 = arith.constant 4 : i32
    %39 = vector.broadcast %c4_i32 : i32 to vector<4x24xi32>
    %40 = arith.cmpi sge, %0, %39 : vector<4x24xi32>
    %c5_i32 = arith.constant 5 : i32
    %41 = vector.broadcast %c5_i32 : i32 to vector<4x24xi32>
    %42 = arith.cmpi sle, %0, %41 : vector<4x24xi32>
    %43 = arith.andi %40, %42 : vector<4x24xi1>
    %44 = arith.extui %43 : vector<4x24xi1> to vector<4x24xi32>
    %cst_10 = arith.constant dense<-2147483648> : vector<4xi32>
    %45 = vector.multi_reduction <maxsi>, %44, %cst_10 [1] : vector<4x24xi32> to vector<4xi32>
    %46 = vector.shape_cast %45 : vector<4xi32> to vector<4x1xi32>
    %c0_i32_11 = arith.constant 0 : i32
    %47 = vector.broadcast %c0_i32_11 : i32 to vector<4x1xi32>
    %48 = arith.cmpi sgt, %46, %47 : vector<4x1xi32>
    %49 = tpu.iota {dimensions = array<i32: 1>} : vector<4x6xi32>
    %c0_i32_12 = arith.constant 0 : i32
    %50 = vector.broadcast %c0_i32_12 : i32 to vector<4x6xi32>
    %51 = arith.cmpi eq, %49, %50 : vector<4x6xi32>
    %52 = vector.broadcast %28 : vector<4x1xi1> to vector<4x6xi1>
    %53 = arith.andi %51, %52 : vector<4x6xi1>
    %c1_i32_13 = arith.constant 1 : i32
    %54 = vector.broadcast %c1_i32_13 : i32 to vector<4x8xi32>
    %55 = arith.cmpi eq, %1, %54 : vector<4x8xi32>
    %56 = arith.extui %55 : vector<4x8xi1> to vector<4x8xi32>
    %cst_14 = arith.constant dense<-2147483648> : vector<4xi32>
    %57 = vector.multi_reduction <maxsi>, %56, %cst_14 [1] : vector<4x8xi32> to vector<4xi32>
    %58 = vector.shape_cast %57 : vector<4xi32> to vector<4x1xi32>
    %c0_i32_15 = arith.constant 0 : i32
    %59 = vector.broadcast %c0_i32_15 : i32 to vector<4x1xi32>
    %60 = arith.cmpi sgt, %58, %59 : vector<4x1xi32>
    %61 = vector.broadcast %60 : vector<4x1xi1> to vector<4x6xi1>
    %62 = arith.andi %51, %61 : vector<4x6xi1>
    %c1_i32_16 = arith.constant 1 : i32
    %63 = vector.broadcast %c1_i32_16 : i32 to vector<4x6xi32>
    %64 = arith.cmpi eq, %49, %63 : vector<4x6xi32>
    %65 = vector.broadcast %28 : vector<4x1xi1> to vector<4x6xi1>
    %66 = arith.andi %64, %65 : vector<4x6xi1>
    %c2_i32 = arith.constant 2 : i32
    %67 = vector.broadcast %c2_i32 : i32 to vector<4x8xi32>
    %68 = arith.cmpi eq, %1, %67 : vector<4x8xi32>
    %69 = arith.extui %68 : vector<4x8xi1> to vector<4x8xi32>
    %cst_17 = arith.constant dense<-2147483648> : vector<4xi32>
    %70 = vector.multi_reduction <maxsi>, %69, %cst_17 [1] : vector<4x8xi32> to vector<4xi32>
    %71 = vector.shape_cast %70 : vector<4xi32> to vector<4x1xi32>
    %c0_i32_18 = arith.constant 0 : i32
    %72 = vector.broadcast %c0_i32_18 : i32 to vector<4x1xi32>
    %73 = arith.cmpi sgt, %71, %72 : vector<4x1xi32>
    %74 = vector.broadcast %73 : vector<4x1xi1> to vector<4x6xi1>
    %75 = arith.andi %64, %74 : vector<4x6xi1>
    %76 = arith.ori %53, %66 : vector<4x6xi1>
    %77 = arith.ori %62, %75 : vector<4x6xi1>
    %c2_i32_19 = arith.constant 2 : i32
    %78 = vector.broadcast %c2_i32_19 : i32 to vector<4x6xi32>
    %79 = arith.cmpi eq, %49, %78 : vector<4x6xi32>
    %80 = vector.broadcast %38 : vector<4x1xi1> to vector<4x6xi1>
    %81 = arith.andi %79, %80 : vector<4x6xi1>
    %c3_i32 = arith.constant 3 : i32
    %82 = vector.broadcast %c3_i32 : i32 to vector<4x8xi32>
    %83 = arith.cmpi eq, %1, %82 : vector<4x8xi32>
    %84 = arith.extui %83 : vector<4x8xi1> to vector<4x8xi32>
    %cst_20 = arith.constant dense<-2147483648> : vector<4xi32>
    %85 = vector.multi_reduction <maxsi>, %84, %cst_20 [1] : vector<4x8xi32> to vector<4xi32>
    %86 = vector.shape_cast %85 : vector<4xi32> to vector<4x1xi32>
    %c0_i32_21 = arith.constant 0 : i32
    %87 = vector.broadcast %c0_i32_21 : i32 to vector<4x1xi32>
    %88 = arith.cmpi sgt, %86, %87 : vector<4x1xi32>
    %89 = vector.broadcast %88 : vector<4x1xi1> to vector<4x6xi1>
    %90 = arith.andi %79, %89 : vector<4x6xi1>
    %91 = arith.ori %76, %81 : vector<4x6xi1>
    %92 = arith.ori %77, %90 : vector<4x6xi1>
    %c3_i32_22 = arith.constant 3 : i32
    %93 = vector.broadcast %c3_i32_22 : i32 to vector<4x6xi32>
    %94 = arith.cmpi eq, %49, %93 : vector<4x6xi32>
    %95 = vector.broadcast %38 : vector<4x1xi1> to vector<4x6xi1>
    %96 = arith.andi %94, %95 : vector<4x6xi1>
    %c4_i32_23 = arith.constant 4 : i32
    %97 = vector.broadcast %c4_i32_23 : i32 to vector<4x8xi32>
    %98 = arith.cmpi eq, %1, %97 : vector<4x8xi32>
    %99 = arith.extui %98 : vector<4x8xi1> to vector<4x8xi32>
    %cst_24 = arith.constant dense<-2147483648> : vector<4xi32>
    %100 = vector.multi_reduction <maxsi>, %99, %cst_24 [1] : vector<4x8xi32> to vector<4xi32>
    %101 = vector.shape_cast %100 : vector<4xi32> to vector<4x1xi32>
    %c0_i32_25 = arith.constant 0 : i32
    %102 = vector.broadcast %c0_i32_25 : i32 to vector<4x1xi32>
    %103 = arith.cmpi sgt, %101, %102 : vector<4x1xi32>
    %104 = vector.broadcast %103 : vector<4x1xi1> to vector<4x6xi1>
    %105 = arith.andi %94, %104 : vector<4x6xi1>
    %106 = arith.ori %91, %96 : vector<4x6xi1>
    %107 = arith.ori %92, %105 : vector<4x6xi1>
    %c4_i32_26 = arith.constant 4 : i32
    %108 = vector.broadcast %c4_i32_26 : i32 to vector<4x6xi32>
    %109 = arith.cmpi eq, %49, %108 : vector<4x6xi32>
    %110 = vector.broadcast %48 : vector<4x1xi1> to vector<4x6xi1>
    %111 = arith.andi %109, %110 : vector<4x6xi1>
    %c5_i32_27 = arith.constant 5 : i32
    %112 = vector.broadcast %c5_i32_27 : i32 to vector<4x8xi32>
    %113 = arith.cmpi eq, %1, %112 : vector<4x8xi32>
    %114 = arith.extui %113 : vector<4x8xi1> to vector<4x8xi32>
    %cst_28 = arith.constant dense<-2147483648> : vector<4xi32>
    %115 = vector.multi_reduction <maxsi>, %114, %cst_28 [1] : vector<4x8xi32> to vector<4xi32>
    %116 = vector.shape_cast %115 : vector<4xi32> to vector<4x1xi32>
    %c0_i32_29 = arith.constant 0 : i32
    %117 = vector.broadcast %c0_i32_29 : i32 to vector<4x1xi32>
    %118 = arith.cmpi sgt, %116, %117 : vector<4x1xi32>
    %119 = vector.broadcast %118 : vector<4x1xi1> to vector<4x6xi1>
    %120 = arith.andi %109, %119 : vector<4x6xi1>
    %121 = arith.ori %106, %111 : vector<4x6xi1>
    %122 = arith.ori %107, %120 : vector<4x6xi1>
    %c5_i32_30 = arith.constant 5 : i32
    %123 = vector.broadcast %c5_i32_30 : i32 to vector<4x6xi32>
    %124 = arith.cmpi eq, %49, %123 : vector<4x6xi32>
    %125 = vector.broadcast %12 : vector<4x1xi1> to vector<4x6xi1>
    %126 = arith.andi %124, %125 : vector<4x6xi1>
    %c6_i32_31 = arith.constant 6 : i32
    %127 = vector.broadcast %c6_i32_31 : i32 to vector<4x8xi32>
    %128 = arith.cmpi eq, %1, %127 : vector<4x8xi32>
    %129 = arith.extui %128 : vector<4x8xi1> to vector<4x8xi32>
    %cst_32 = arith.constant dense<-2147483648> : vector<4xi32>
    %130 = vector.multi_reduction <maxsi>, %129, %cst_32 [1] : vector<4x8xi32> to vector<4xi32>
    %131 = vector.shape_cast %130 : vector<4xi32> to vector<4x1xi32>
    %c0_i32_33 = arith.constant 0 : i32
    %132 = vector.broadcast %c0_i32_33 : i32 to vector<4x1xi32>
    %133 = arith.cmpi sgt, %131, %132 : vector<4x1xi32>
    %134 = vector.broadcast %133 : vector<4x1xi1> to vector<4x6xi1>
    %135 = arith.andi %124, %134 : vector<4x6xi1>
    %136 = arith.ori %121, %126 : vector<4x6xi1>
    %137 = arith.ori %122, %135 : vector<4x6xi1>
    %138 = arith.extui %136 : vector<4x6xi1> to vector<4x6xi32>
    %139 = arith.sitofp %138 : vector<4x6xi32> to vector<4x6xf32>
    %140 = arith.extui %137 : vector<4x6xi1> to vector<4x6xi32>
    %141 = arith.sitofp %140 : vector<4x6xi32> to vector<4x6xf32>
    %142 = math.log %2 : vector<4x6xf32>
    %cst_34 = arith.constant -1.000000e+02 : f32
    %143 = vector.broadcast %cst_34 : f32 to vector<4x6xf32>
    %144 = arith.maximumf %142, %143 : vector<4x6xf32>
    %cst_35 = arith.constant 1.000000e+00 : f32
    %145 = vector.broadcast %cst_35 : f32 to vector<4x6xf32>
    %146 = arith.subf %145, %2 : vector<4x6xf32>
    %147 = math.log %146 : vector<4x6xf32>
    %cst_36 = arith.constant -1.000000e+02 : f32
    %148 = vector.broadcast %cst_36 : f32 to vector<4x6xf32>
    %149 = arith.maximumf %147, %148 : vector<4x6xf32>
    %150 = arith.mulf %141, %144 : vector<4x6xf32>
    %cst_37 = arith.constant 1.000000e+00 : f32
    %151 = vector.broadcast %cst_37 : f32 to vector<4x6xf32>
    %152 = arith.subf %151, %141 : vector<4x6xf32>
    %153 = arith.mulf %152, %149 : vector<4x6xf32>
    %154 = arith.addf %150, %153 : vector<4x6xf32>
    %cst_38 = arith.constant 0.000000e+00 : f32
    %155 = vector.broadcast %cst_38 : f32 to vector<4x6xf32>
    %156 = arith.subf %155, %154 : vector<4x6xf32>
    %157 = arith.mulf %156, %139 : vector<4x6xf32>
    %158 = vector.shape_cast %157 : vector<4x6xf32> to vector<1x4x6xf32>
    %cst_39 = arith.constant dense<0.000000e+00> : vector<1xf32>
    %159 = vector.multi_reduction <add>, %158, %cst_39 [1, 2] : vector<1x4x6xf32> to vector<1xf32>
    %160 = vector.shape_cast %159 : vector<1xf32> to vector<1x1x1xf32>
    %161 = vector.extract %160[0, 0, 0] : f32 from vector<1x1x1xf32>
    %162 = vector.broadcast %161 : f32 to vector<1x1xf32>
    %163 = vector.shape_cast %139 : vector<4x6xf32> to vector<1x4x6xf32>
    %cst_40 = arith.constant dense<0.000000e+00> : vector<1xf32>
    %164 = vector.multi_reduction <add>, %163, %cst_40 [1, 2] : vector<1x4x6xf32> to vector<1xf32>
    %165 = vector.shape_cast %164 : vector<1xf32> to vector<1x1x1xf32>
    %166 = vector.extract %165[0, 0, 0] : f32 from vector<1x1x1xf32>
    %167 = vector.broadcast %166 : f32 to vector<1x1xf32>
    %168 = arith.divf %162, %167 : vector<1x1xf32>
    %c0_41 = arith.constant 0 : index
    %c0_42 = arith.constant 0 : index
    %169 = vector.load %arg3[%c0_41, %c0_42] : memref<1x1xf32, #tpu.memory_space<vmem>>, vector<1x1xf32>
    tpu.vector_store %arg3[%c0_41, %c0_42], %168 {strides = array<i32>} : memref<1x1xf32, #tpu.memory_space<vmem>>, vector<1x1xf32>,
    return
  }
}

</mosaic_0001>

<llo_original>
// kernel: tpu_custom_call.1
$region0: #{tpu_custom_call.1}
  #allocation0 [shape = 'u32[]', space=smem, size = 0x4, offset = 0x4, fixed_abs, tag = 'smem constant byte address 0x4 - core index']
  #allocation1 [shape = 'u32[144,128]{1,0:T(1,128)}', space=vmem, size = 0x12000, scoped, tag = 'internal scratch']
  %s0 = inlined_call_operand.hbm [shape: f32[4,6], index: 0, kind: input, shape index: {}]
  %s1 = inlined_call_operand.hbm [shape: s32[4,24], index: 1, kind: input, shape index: {}]
  %s2 = inlined_call_operand.hbm [shape: s32[4,8], index: 2, kind: input, shape index: {}]
  %s3 = inlined_call_operand.hbm [shape: f32[1,1], index: 3, kind: output, shape index: {}]
  %s4 = sld [smem:[#allocation0]]
  $region34: #{tpu_custom_call.1} parent=0
    _
  %s6 = ssub.s32 1, %s4
  %s7 = scalar_select 0, %s6, %s4
  $region1: #{tpu_custom_call.1} parent=0
    #allocation2 [shape = 'u8[2048]{0}', space=vmem, size = 0x800, scoped, tag = 'input window, operand 0, single buffered']
    #allocation3 [shape = 's32[1]{0}', space=sflag, size = 0x4, scoped, tag = 'scoped memory for tpu_custom_call.1']
    #allocation4 [shape = 's32[1]{0}', space=sflag, size = 0x4, scoped, tag = 'scoped memory for tpu_custom_call.1']
    #allocation5 [shape = 'u8[2048]{0}', space=vmem, size = 0x800, scoped, tag = 'input window, operand 1, single buffered']
    #allocation6 [shape = 's32[1]{0}', space=sflag, size = 0x4, scoped, tag = 'scoped memory for tpu_custom_call.1']
    #allocation7 [shape = 'u8[2048]{0}', space=vmem, size = 0x800, scoped, tag = 'input window, operand 2, single buffered']
    #allocation8 [shape = 'u8[512]{0}', space=vmem, size = 0x400, scoped, tag = 'output window, operand 0, single buffered']
    %8 = vsyncpa [#allocation3], 0
    %9 = vsyncpa [#allocation6], 0
    %10 = vsyncpa [#allocation4], 0
    // Predicated region
    $region2: #{tpu_custom_call.1} parent=1 // pred_check
      _
    $region3: #{tpu_custom_call.1} parent=1 // pred_check_branch
      %12 = sbr.rel (0) target = $region5
    $region4: #{tpu_custom_call.1} parent=1 // pred_region
      %s14 = ssub.s32 64, 64
      %15 = vsyncadd [#allocation3], %s14
      %s17 = sshll.u32 [#allocation2], 4
      %s18 = int_to_ptr.vmem [resolvable:$true] %s17
      %20 = dma.hbm_to_vmem [thread:$0]  %s0, 64, %s18, [#allocation3]
    $region5: #{tpu_custom_call.1} parent=1 // pred_fallthru
      _
    // Predicated region
    $region6: #{tpu_custom_call.1} parent=1 // pred_check
      _
    $region7: #{tpu_custom_call.1} parent=1 // pred_check_branch
      %22 = sbr.rel (0) target = $region9
    $region8: #{tpu_custom_call.1} parent=1 // pred_region
      %s24 = ssub.s32 64, 64
      %25 = vsyncadd [#allocation6], %s24
      %s27 = sshll.u32 [#allocation5], 4
      %s28 = int_to_ptr.vmem [resolvable:$true] %s27
      %30 = dma.hbm_to_vmem [thread:$0]  %s1, 64, %s28, [#allocation6]
    $region9: #{tpu_custom_call.1} parent=1 // pred_fallthru
      _
    // Predicated region
    $region10: #{tpu_custom_call.1} parent=1 // pred_check
      _
    $region11: #{tpu_custom_call.1} parent=1 // pred_check_branch
      %32 = sbr.rel (0) target = $region13
    $region12: #{tpu_custom_call.1} parent=1 // pred_region
      %s34 = ssub.s32 64, 64
      %35 = vsyncadd [#allocation6], %s34
      %s37 = sshll.u32 [#allocation7], 4
      %s38 = int_to_ptr.vmem [resolvable:$true] %s37
      %40 = dma.hbm_to_vmem [thread:$0]  %s2, 64, %s38, [#allocation6]
    $region13: #{tpu_custom_call.1} parent=1 // pred_fallthru
      _
    // Predicated region
    $region14: #{tpu_custom_call.1} parent=1 // pred_check
      _
    $region15: #{tpu_custom_call.1} parent=1 // pred_check_branch
      %42 = sbr.rel (0) target = $region17
    $region16: #{tpu_custom_call.1} parent=1 // pred_region
      %43 = dma.done [#allocation3], 64
    $region17: #{tpu_custom_call.1} parent=1 // pred_fallthru
      _
    // Predicated region
    $region18: #{tpu_custom_call.1} parent=1 // pred_check
      _
    $region19: #{tpu_custom_call.1} parent=1 // pred_check_branch
      %45 = sbr.rel (0) target = $region21
    $region20: #{tpu_custom_call.1} parent=1 // pred_region
      %46 = dma.done [#allocation6], 64
    $region21: #{tpu_custom_call.1} parent=1 // pred_fallthru
      _
    // Predicated region
    $region22: #{tpu_custom_call.1} parent=1 // pred_check
      _
    $region23: #{tpu_custom_call.1} parent=1 // pred_check_branch
      %48 = sbr.rel (0) target = $region25
    $region24: #{tpu_custom_call.1} parent=1 // pred_region
      %49 = dma.done [#allocation6], 64
    $region25: #{tpu_custom_call.1} parent=1 // pred_fallthru
      _
    %v50 = vld [vmem:[#allocation5] sm:$0xf]
    %v51 = vld [vmem:[#allocation7] sm:$0xf]
    %v52 = vld [vmem:[#allocation2] sm:$0xf]
    %vm53 = vcmp.ge.s32.totalorder %v50, 22
    %vm54 = vcmp.le.s32.totalorder %v50, 23
    %vm55 = vmand %vm53, %vm54
    %v56 = vsel %vm55, 1, 0
    %vm57 = vcmask 191488
    %v58 = vsel %vm57, %v56, 2147483648
    %v59 = vand.u32 %v58, 65535
    %v60 = vshra.s32 %v58, 16
    %v61 = vcvt.s32.f32 %v59
    %v62 = vcvt.s32.f32 %v60
    %63 = vmax.xlane.f32.xlu0 %v62
    %v64 = vpop.xlane.xlu0 %63
    %vm65 = vcmp.eq.f32.partialorder %v62, %v64
    %v66 = vsel %vm65, %v61, -inf
    %67 = vmax.xlane.f32.xlu0 %v66
    %v68 = vpop.xlane.xlu0 %67
    %v69 = vcvt.f32.s32 %v68
    %v70 = vcvt.f32.s32 %v64
    %v71 = vshll.u32 %v70, 16
    %v72 = vadd.s32 %v71, %v69
    %vm73 = vcmp.gt.s32.totalorder %v72, 0
    %vm74 = vcmp.ge.s32.totalorder %v50, 0
    %vm75 = vcmp.le.s32.totalorder %v50, 1
    %vm76 = vmand %vm74, %vm75
    %vm77 = vcmp.ge.s32.totalorder %v50, 14
    %vm78 = vcmp.le.s32.totalorder %v50, 21
    %vm79 = vmand %vm77, %vm78
    %vm80 = vmor %vm76, %vm79
    %v81 = vsel %vm80, 1, 0
    %v82 = vsel %vm57, %v81, 2147483648
    %v83 = vand.u32 %v82, 65535
    %v84 = vshra.s32 %v82, 16
    %v85 = vcvt.s32.f32 %v83
    %v86 = vcvt.s32.f32 %v84
    %87 = vmax.xlane.f32.xlu0 %v86
    %v88 = vpop.xlane.xlu0 %87
    %vm89 = vcmp.eq.f32.partialorder %v86, %v88
    %v90 = vsel %vm89, %v85, -inf
    %91 = vmax.xlane.f32.xlu0 %v90
    %v92 = vpop.xlane.xlu0 %91
    %v93 = vcvt.f32.s32 %v92
    %v94 = vcvt.f32.s32 %v88
    %v95 = vshll.u32 %v94, 16
    %v96 = vadd.s32 %v95, %v93
    %vm97 = vcmp.gt.s32.totalorder %v96, 0
    %vm98 = vcmp.ge.s32.totalorder %v50, 6
    %vm99 = vcmp.le.s32.totalorder %v50, 13
    %vm100 = vmand %vm98, %vm99
    %v101 = vsel %vm100, 1, 0
    %v102 = vsel %vm57, %v101, 2147483648
    %v103 = vand.u32 %v102, 65535
    %v104 = vshra.s32 %v102, 16
    %v105 = vcvt.s32.f32 %v103
    %v106 = vcvt.s32.f32 %v104
    %107 = vmax.xlane.f32.xlu0 %v106
    %v108 = vpop.xlane.xlu0 %107
    %vm109 = vcmp.eq.f32.partialorder %v106, %v108
    %v110 = vsel %vm109, %v105, -inf
    %111 = vmax.xlane.f32.xlu0 %v110
    %v112 = vpop.xlane.xlu0 %111
    %v113 = vcvt.f32.s32 %v112
    %v114 = vcvt.f32.s32 %v108
    %v115 = vshll.u32 %v114, 16
    %v116 = vadd.s32 %v115, %v113
    %vm117 = vcmp.gt.s32.totalorder %v116, 0
    %vm118 = vcmp.ge.s32.totalorder %v50, 4
    %vm119 = vcmp.le.s32.totalorder %v50, 5
    %vm120 = vmand %vm118, %vm119
    %v121 = vsel %vm120, 1, 0
    %v122 = vsel %vm57, %v121, 2147483648
    %v123 = vand.u32 %v122, 65535
    %v124 = vshra.s32 %v122, 16
    %v125 = vcvt.s32.f32 %v123
    %v126 = vcvt.s32.f32 %v124
    %127 = vmax.xlane.f32.xlu0 %v126
    %v128 = vpop.xlane.xlu0 %127
    %vm129 = vcmp.eq.f32.partialorder %v126, %v128
    %v130 = vsel %vm129, %v125, -inf
    %131 = vmax.xlane.f32.xlu0 %v130
    %v132 = vpop.xlane.xlu0 %131
    %v133 = vcvt.f32.s32 %v132
    %v134 = vcvt.f32.s32 %v128
    %v135 = vshll.u32 %v134, 16
    %v136 = vadd.s32 %v135, %v133
    %vm137 = vcmp.gt.s32.totalorder %v136, 0
    %v138 = vlaneseq
    %v139 = vand.u32 %v138, 127
    %vm140 = vcmp.eq.s32.totalorder %v139, 0
    %v141 = vsel %vm97, 1, 0
    %vm142 = vcmp.eq.s32.totalorder %v141, 1
    %vm143 = vmand %vm140, %vm142
    %vm144 = vcmp.eq.s32.totalorder %v51, 1
    %v145 = vsel %vm144, 1, 0
    %vm146 = vcmask 60416
    %v147 = vsel %vm146, %v145, 2147483648
    %v148 = vand.u32 %v147, 65535
    %v149 = vshra.s32 %v147, 16
    %v150 = vcvt.s32.f32 %v148
    %v151 = vcvt.s32.f32 %v149
    %152 = vmax.xlane.f32.xlu0 %v151
    %v153 = vpop.xlane.xlu0 %152
    %vm154 = vcmp.eq.f32.partialorder %v151, %v153
    %v155 = vsel %vm154, %v150, -inf
    %156 = vmax.xlane.f32.xlu0 %v155
    %v157 = vpop.xlane.xlu0 %156
    %v158 = vcvt.f32.s32 %v157
    %v159 = vcvt.f32.s32 %v153
    %v160 = vshll.u32 %v159, 16
    %v161 = vadd.s32 %v160, %v158
    %vm162 = vcmp.gt.s32.totalorder %v161, 0
    %v163 = vsel %vm162, 1, 0
    %vm164 = vcmp.eq.s32.totalorder %v163, 1
    %vm165 = vmand %vm140, %vm164
    %vm166 = vcmp.eq.s32.totalorder %v139, 1
    %vm167 = vmand %vm166, %vm142
    %vm168 = vcmp.eq.s32.totalorder %v51, 2
    %v169 = vsel %vm168, 1, 0
    %v170 = vsel %vm146, %v169, 2147483648
    %v171 = vand.u32 %v170, 65535
    %v172 = vshra.s32 %v170, 16
    %v173 = vcvt.s32.f32 %v171
    %v174 = vcvt.s32.f32 %v172
    %175 = vmax.xlane.f32.xlu0 %v174
    %v176 = vpop.xlane.xlu0 %175
    %vm177 = vcmp.eq.f32.partialorder %v174, %v176
    %v178 = vsel %vm177, %v173, -inf
    %179 = vmax.xlane.f32.xlu0 %v178
    %v180 = vpop.xlane.xlu0 %179
    %v181 = vcvt.f32.s32 %v180
    %v182 = vcvt.f32.s32 %v176
    %v183 = vshll.u32 %v182, 16
    %v184 = vadd.s32 %v183, %v181
    %vm185 = vcmp.gt.s32.totalorder %v184, 0
    %v186 = vsel %vm185, 1, 0
    %vm187 = vcmp.eq.s32.totalorder %v186, 1
    %vm188 = vmand %vm166, %vm187
    %vm189 = vmor %vm143, %vm167
    %vm190 = vmor %vm165, %vm188
    %vm191 = vcmp.eq.s32.totalorder %v139, 2
    %v192 = vsel %vm117, 1, 0
    %vm193 = vcmp.eq.s32.totalorder %v192, 1
    %vm194 = vmand %vm191, %vm193
    %vm195 = vcmp.eq.s32.totalorder %v51, 3
    %v196 = vsel %vm195, 1, 0
    %v197 = vsel %vm146, %v196, 2147483648
    %v198 = vand.u32 %v197, 65535
    %v199 = vshra.s32 %v197, 16
    %v200 = vcvt.s32.f32 %v198
    %v201 = vcvt.s32.f32 %v199
    %202 = vmax.xlane.f32.xlu0 %v201
    %v203 = vpop.xlane.xlu0 %202
    %vm204 = vcmp.eq.f32.partialorder %v201, %v203
    %v205 = vsel %vm204, %v200, -inf
    %206 = vmax.xlane.f32.xlu0 %v205
    %v207 = vpop.xlane.xlu0 %206
    %v208 = vcvt.f32.s32 %v207
    %v209 = vcvt.f32.s32 %v203
    %v210 = vshll.u32 %v209, 16
    %v211 = vadd.s32 %v210, %v208
    %vm212 = vcmp.gt.s32.totalorder %v211, 0
    %v213 = vsel %vm212, 1, 0
    %vm214 = vcmp.eq.s32.totalorder %v213, 1
    %vm215 = vmand %vm191, %vm214
    %vm216 = vmor %vm189, %vm194
    %vm217 = vmor %vm190, %vm215
    %vm218 = vcmp.eq.s32.totalorder %v139, 3
    %vm219 = vmand %vm218, %vm193
    %vm220 = vcmp.eq.s32.totalorder %v51, 4
    %v221 = vsel %vm220, 1, 0
    %v222 = vsel %vm146, %v221, 2147483648
    %v223 = vand.u32 %v222, 65535
    %v224 = vshra.s32 %v222, 16
    %v225 = vcvt.s32.f32 %v223
    %v226 = vcvt.s32.f32 %v224
    %227 = vmax.xlane.f32.xlu0 %v226
    %v228 = vpop.xlane.xlu0 %227
    %vm229 = vcmp.eq.f32.partialorder %v226, %v228
    %v230 = vsel %vm229, %v225, -inf
    %231 = vmax.xlane.f32.xlu0 %v230
    %v232 = vpop.xlane.xlu0 %231
    %v233 = vcvt.f32.s32 %v232
    %v234 = vcvt.f32.s32 %v228
    %v235 = vshll.u32 %v234, 16
    %v236 = vadd.s32 %v235, %v233
    %vm237 = vcmp.gt.s32.totalorder %v236, 0
    %v238 = vsel %vm237, 1, 0
    %vm239 = vcmp.eq.s32.totalorder %v238, 1
    %vm240 = vmand %vm218, %vm239
    %vm241 = vmor %vm216, %vm219
    %vm242 = vmor %vm217, %vm240
    %vm243 = vcmp.eq.s32.totalorder %v139, 4
    %v244 = vsel %vm137, 1, 0
    %vm245 = vcmp.eq.s32.totalorder %v244, 1
    %vm246 = vmand %vm243, %vm245
    %vm247 = vcmp.eq.s32.totalorder %v51, 5
    %v248 = vsel %vm247, 1, 0
    %v249 = vsel %vm146, %v248, 2147483648
    %v250 = vand.u32 %v249, 65535
    %v251 = vshra.s32 %v249, 16
    %v252 = vcvt.s32.f32 %v250
    %v253 = vcvt.s32.f32 %v251
    %254 = vmax.xlane.f32.xlu0 %v253
    %v255 = vpop.xlane.xlu0 %254
    %vm256 = vcmp.eq.f32.partialorder %v253, %v255
    %v257 = vsel %vm256, %v252, -inf
    %258 = vmax.xlane.f32.xlu0 %v257
    %v259 = vpop.xlane.xlu0 %258
    %v260 = vcvt.f32.s32 %v259
    %v261 = vcvt.f32.s32 %v255
    %v262 = vshll.u32 %v261, 16
    %v263 = vadd.s32 %v262, %v260
    %vm264 = vcmp.gt.s32.totalorder %v263, 0
    %v265 = vsel %vm264, 1, 0
    %vm266 = vcmp.eq.s32.totalorder %v265, 1
    %vm267 = vmand %vm243, %vm266
    %vm268 = vmor %vm241, %vm246
    %vm269 = vmor %vm242, %vm267
    %vm270 = vcmp.eq.s32.totalorder %v139, 5
    %v271 = vsel %vm73, 1, 0
    %vm272 = vcmp.eq.s32.totalorder %v271, 1
    %vm273 = vmand %vm270, %vm272
    %vm274 = vcmp.eq.s32.totalorder %v51, 6
    %v275 = vsel %vm274, 1, 0
    %v276 = vsel %vm146, %v275, 2147483648
    %v277 = vand.u32 %v276, 65535
    %v278 = vshra.s32 %v276, 16
    %v279 = vcvt.s32.f32 %v277
    %v280 = vcvt.s32.f32 %v278
    %281 = vmax.xlane.f32.xlu0 %v280
    %v282 = vpop.xlane.xlu0 %281
    %vm283 = vcmp.eq.f32.partialorder %v280, %v282
    %v284 = vsel %vm283, %v279, -inf
    %285 = vmax.xlane.f32.xlu0 %v284
    %v286 = vpop.xlane.xlu0 %285
    %v287 = vcvt.f32.s32 %v286
    %v288 = vcvt.f32.s32 %v282
    %v289 = vshll.u32 %v288, 16
    %v290 = vadd.s32 %v289, %v287
    %vm291 = vcmp.gt.s32.totalorder %v290, 0
    %v292 = vsel %vm291, 1, 0
    %vm293 = vcmp.eq.s32.totalorder %v292, 1
    %vm294 = vmand %vm270, %vm293
    %vm295 = vmor %vm268, %vm273
    %vm296 = vmor %vm269, %vm294
    %v297 = vsel %vm295, 1, 0
    %v298 = vcvt.s32.f32 %v297
    %v299 = vsel %vm296, 1, 0
    %v300 = vcvt.s32.f32 %v299
    %v301 = vlog2.pop %v52
    %v302 = vmul.f32 %v301, 0.6931472
    %v303 = vmax.f32 %v302, -100.0
    %v304 = vsub.f32 1.0, %v52
    %v305 = vlog2.pop %v304
    %v306 = vmul.f32 %v305, 0.6931472
    %v307 = vmax.f32 %v306, -100.0
    %v308 = vmul.f32 %v300, %v303
    %v309 = vsub.f32 1.0, %v300
    %v310 = vmul.f32 %v309, %v307
    %v311 = vadd.f32 %v308, %v310
    %v312 = vsub.f32 0.0, %v311
    %v313 = vmul.f32 %v312, %v298
    %vm314 = vcmask 44032
    %v315 = vsel %vm314, %v313, 0.0
    %316 = vadd.xlane.f32.xlu0 %v315
    %v317 = vpop.xlane.xlu0 %316
    %v318 = vrot.slane %v317, 4
    %v319 = vadd.f32 %v317, %v318
    %v320 = vrot.slane %v319, 2
    %v321 = vadd.f32 %v319, %v320
    %v322 = vrot.slane %v321, 1
    %v323 = vadd.f32 %v321, %v322
    %s324 = vtos %v323
    %v325 = vstv %s324
    %v326 = vsel %vm314, %v298, 0.0
    %327 = vadd.xlane.f32.xlu0 %v326
    %v328 = vpop.xlane.xlu0 %327
    %v329 = vrot.slane %v328, 4
    %v330 = vadd.f32 %v328, %v329
    %v331 = vrot.slane %v330, 2
    %v332 = vadd.f32 %v330, %v331
    %v333 = vrot.slane %v332, 1
    %v334 = vadd.f32 %v332, %v333
    %s335 = vtos %v334
    %v336 = vstv %s335
    %v337 = vrcp.pop %v336
    %v338 = vmul.f32 %v325, %v337
    %vm339 = vcmask 0
    %340 = vst.msk [vmem:[#allocation8] sm:$0x1] %vm339, %v338
    // Predicated region
    $region26: #{tpu_custom_call.1} parent=1 // pred_check
      _
    $region27: #{tpu_custom_call.1} parent=1 // pred_check_branch
      %342 = sbr.rel (0) target = $region29
    $region28: #{tpu_custom_call.1} parent=1 // pred_region
      %s344 = ssub.s32 16, 16
      %345 = vsyncadd [#allocation4], %s344
      %s347 = sshll.u32 [#allocation8], 4
      %s348 = int_to_ptr.vmem [resolvable:$true] %s347
      %350 = dma.vmem_to_hbm [thread:$0]  %s348, 16, %s3, [#allocation4]
    $region29: #{tpu_custom_call.1} parent=1 // pred_fallthru
      _
    // Predicated region
    $region30: #{tpu_custom_call.1} parent=1 // pred_check
      _
    $region31: #{tpu_custom_call.1} parent=1 // pred_check_branch
      %352 = sbr.rel (0) target = $region33
    $region32: #{tpu_custom_call.1} parent=1 // pred_region
      %353 = dma.done [#allocation4], 16
    $region33: #{tpu_custom_call.1} parent=1 // pred_fallthru
      _
    %354 = vsyncpa [#allocation3], 1
    %355 = vsyncpa [#allocation6], 1
    %356 = vsyncpa [#allocation4], 1

</llo_original>
